<compile_context>
chip_gen: v6e
topology: v6e:2x2x1
jax: 0.10.0
libtpu: 0.0.40
codegen_flags: <defaults>
</compile_context>

<pallas_src>
import math

import jax
import jax.numpy as jnp
from jax import lax
from jax.experimental import pallas as pl
from jax.experimental.pallas import tpu as pltpu

# ----------------------------- problem sizes --------------------------------
B, C, H, W = 2, 4, 16, 16          # small NCHW input
HIDDEN = 1000                      # densenet classifier output width
FEAT_NUM = 32                      # feature_net output width
CLS_NUM = 22                       # Arcsoftmax class count (hard-coded in module)
OUT_PAD = 128                      # lane-dense output slab width
S_CONST = 1.0                      # forward() calls arc_softmax(feature, 1, 1)
M_CONST = 1.0
COS_M = math.cos(M_CONST)
TEN_SIN_M = 10.0 * math.sin(M_CONST)
BN_EPS = 1e-5
NORM_EPS = 1e-12                   # F.normalize default eps


def facenet_kernel(xg_ref, wback_ref, gamma_ref, beta_ref, wlin_ref, wnorm_ref,
                   out_ref):
    # ---- backbone stand-in: GAP already done in wrapper; Linear(C -> 1000) --
    y = jnp.dot(xg_ref[...], wback_ref[...],
                preferred_element_type=jnp.float32)         # [B, 1000]

    # ---- feature_net: BatchNorm1d(1000), train-mode batch stats -------------
    mean = jnp.mean(y, axis=0, keepdims=True)               # [1, 1000]
    var = jnp.mean((y - mean) ** 2, axis=0, keepdims=True)  # biased var (PyTorch)
    y_bn = (y - mean) * lax.rsqrt(var + BN_EPS) * gamma_ref[...] + beta_ref[...]

    # ---- LeakyReLU(0.1) ------------------------------------------------------
    h = jnp.where(y_bn > 0, y_bn, 0.1 * y_bn)

    # ---- Linear(1000, feat_num, bias=False) ----------------------------------
    feature = jnp.dot(h, wlin_ref[...],
                      preferred_element_type=jnp.float32)   # [B, FEAT_NUM]

    # ---- Arcsoftmax(feature, s=1, m=1) ---------------------------------------
    # x_norm = F.normalize(feature, dim=1)  (rsqrt -> EUP, no divide chain)
    sumsq = jnp.sum(feature * feature, axis=1, keepdims=True)
    x_norm = feature * lax.rsqrt(jnp.maximum(sumsq, NORM_EPS * NORM_EPS))

    # w_norm is pre-normalized in the wrapper (static per call).
    # raw = 10 * cosa; with s = 1 the softmax exponents are:
    #   e_cos = exp(s * cosa * 10)        = exp(raw)
    #   e_arc = exp(s * cos(a + m) * 10)  = exp(raw*cos(m) - 10*sin(m)*sina)
    raw = jnp.dot(x_norm, wnorm_ref[...],
                  preferred_element_type=jnp.float32)       # [B, CLS_NUM]
    cosa = 0.1 * raw
    sina = jnp.sqrt(jnp.maximum(1.0 - cosa * cosa, 0.0))

    e_cos = jnp.exp(raw)
    e_arc = jnp.exp(raw * COS_M - TEN_SIN_M * sina)
    denom = jnp.sum(e_cos, axis=1, keepdims=True) - e_cos + e_arc
    arc = e_arc * pl.reciprocal(denom, approx=True)         # denom > 0 always

    # ---- single lane-dense output slab: one store ----------------------------
    pad = jnp.zeros((B, OUT_PAD - FEAT_NUM - CLS_NUM), dtype=jnp.float32)
    out_ref[...] = jnp.concatenate([feature, arc, pad], axis=-1)


def facenet_forward(x, w_back, bn_gamma, bn_beta, w_lin, w_arc):
    # Global average pool in the wrapper: [B, C, H, W] -> [B, C].
    # (Equivalent to the previous folded K=1024 matmul up to fp associativity,
    #  but the kernel now only reads the real 16 KiB backbone weight.)
    x_gap = jnp.mean(x, axis=(2, 3))                           # [B, C]

    # Hoist the static Arcsoftmax weight normalization (F.normalize(w, dim=0)).
    w_nrm = jnp.sqrt(jnp.sum(w_arc * w_arc, axis=0, keepdims=True))
    w_norm = w_arc / jnp.maximum(w_nrm, NORM_EPS)              # [FEAT_NUM, CLS_NUM]

    vmem = pl.BlockSpec(memory_space=pltpu.MemorySpace.VMEM)
    slab = pl.pallas_call(
        facenet_kernel,
        out_shape=jax.ShapeDtypeStruct((B, OUT_PAD), jnp.float32),
        in_specs=[vmem] * 6,        # whole arrays resident in VMEM, no grid
        out_specs=vmem,
    )(x_gap, w_back, bn_gamma, bn_beta, w_lin, w_norm)

    feature = slab[:, :FEAT_NUM]
    arcsoft = slab[:, FEAT_NUM:FEAT_NUM + CLS_NUM]
    return feature, arcsoft


if __name__ == "__main__":
    key = jax.random.PRNGKey(0)
    k_x, k_back, k_lin, k_arc = jax.random.split(key, 4)

    # input
    x = jax.random.normal(k_x, (B, C, H, W), dtype=jnp.float32)

    # deterministic parameter init (shapes from the module __init__)
    w_back = jax.random.normal(k_back, (C, HIDDEN), dtype=jnp.float32) * 0.05
    bn_gamma = jnp.ones((1, HIDDEN), dtype=jnp.float32)     # BatchNorm1d default
    bn_beta = jnp.zeros((1, HIDDEN), dtype=jnp.float32)
    w_lin = jax.random.normal(k_lin, (HIDDEN, FEAT_NUM), dtype=jnp.float32) * 0.02
    w_arc = jax.random.normal(k_arc, (FEAT_NUM, CLS_NUM), dtype=jnp.float32)

    feature, arcsoft = jax.block_until_ready(
        facenet_forward(x, w_back, bn_gamma, bn_beta, w_lin, w_arc))

    assert feature.shape == (B, FEAT_NUM) and arcsoft.shape == (B, CLS_NUM)
    assert bool(jnp.all(jnp.isfinite(feature))) and bool(jnp.all(jnp.isfinite(arcsoft)))
    print("KERNEL_OK")
</pallas_src>

<mosaic_0001>
module attributes {stable_mosaic.version = 11 : i64} {
  func.func @facenet_kernel(%arg0: memref<2x4xf32, #tpu.memory_space<vmem>>, %arg1: memref<4x1000xf32, #tpu.memory_space<vmem>>, %arg2: memref<1x1000xf32, #tpu.memory_space<vmem>>, %arg3: memref<1x1000xf32, #tpu.memory_space<vmem>>, %arg4: memref<1000x32xf32, #tpu.memory_space<vmem>>, %arg5: memref<32x22xf32, #tpu.memory_space<vmem>>, %arg6: memref<2x128xf32, #tpu.memory_space<vmem>>) attributes {dimension_semantics = [], scalar_prefetch = 0 : i64, scratch_operands = 0 : i64, tpu.core_type = #tpu.core_type<tc>} {
    %c0 = arith.constant 0 : index
    %c0_0 = arith.constant 0 : index
    %0 = vector.load %arg0[%c0, %c0_0] : memref<2x4xf32, #tpu.memory_space<vmem>>, vector<2x4xf32>
    %c0_1 = arith.constant 0 : index
    %c0_2 = arith.constant 0 : index
    %1 = vector.load %arg1[%c0_1, %c0_2] : memref<4x1000xf32, #tpu.memory_space<vmem>>, vector<4x1000xf32>
    %cst = arith.constant dense<0.000000e+00> : vector<2x1000xf32>
    %2 = tpu.matmul %0, %1, %cst {dimension_numbers = #tpu.dot_dimension_numbers<[1], [0], [0], [1], [0, 0, 1, 1], [], []>} : vector<2x4xf32>, vector<4x1000xf32>, vector<2x1000xf32> -> vector<2x1000xf32>
    %cst_3 = arith.constant dense<0.000000e+00> : vector<1000xf32>
    %3 = vector.multi_reduction <add>, %2, %cst_3 [0] : vector<2x1000xf32> to vector<1000xf32>
    %4 = vector.shape_cast %3 : vector<1000xf32> to vector<1x1000xf32>
    %cst_4 = arith.constant 2.000000e+00 : f32
    %5 = vector.broadcast %cst_4 : f32 to vector<1x1000xf32>
    %6 = arith.divf %4, %5 : vector<1x1000xf32>
    %7 = vector.broadcast %6 : vector<1x1000xf32> to vector<2x1000xf32>
    %8 = arith.subf %2, %7 : vector<2x1000xf32>
    %9 = arith.mulf %8, %8 : vector<2x1000xf32>
    %cst_5 = arith.constant dense<0.000000e+00> : vector<1000xf32>
    %10 = vector.multi_reduction <add>, %9, %cst_5 [0] : vector<2x1000xf32> to vector<1000xf32>
    %11 = vector.shape_cast %10 : vector<1000xf32> to vector<1x1000xf32>
    %cst_6 = arith.constant 2.000000e+00 : f32
    %12 = vector.broadcast %cst_6 : f32 to vector<1x1000xf32>
    %13 = arith.divf %11, %12 : vector<1x1000xf32>
    %14 = vector.broadcast %6 : vector<1x1000xf32> to vector<2x1000xf32>
    %15 = arith.subf %2, %14 : vector<2x1000xf32>
    %cst_7 = arith.constant 9.99999974E-6 : f32
    %16 = vector.broadcast %cst_7 : f32 to vector<1x1000xf32>
    %17 = arith.addf %13, %16 : vector<1x1000xf32>
    %18 = math.rsqrt %17 : vector<1x1000xf32>
    %19 = vector.broadcast %18 : vector<1x1000xf32> to vector<2x1000xf32>
    %20 = arith.mulf %15, %19 : vector<2x1000xf32>
    %c0_8 = arith.constant 0 : index
    %c0_9 = arith.constant 0 : index
    %21 = vector.load %arg2[%c0_8, %c0_9] : memref<1x1000xf32, #tpu.memory_space<vmem>>, vector<1x1000xf32>
    %22 = vector.broadcast %21 : vector<1x1000xf32> to vector<2x1000xf32>
    %23 = arith.mulf %20, %22 : vector<2x1000xf32>
    %c0_10 = arith.constant 0 : index
    %c0_11 = arith.constant 0 : index
    %24 = vector.load %arg3[%c0_10, %c0_11] : memref<1x1000xf32, #tpu.memory_space<vmem>>, vector<1x1000xf32>
    %25 = vector.broadcast %24 : vector<1x1000xf32> to vector<2x1000xf32>
    %26 = arith.addf %23, %25 : vector<2x1000xf32>
    %cst_12 = arith.constant 0.000000e+00 : f32
    %27 = vector.broadcast %cst_12 : f32 to vector<2x1000xf32>
    %28 = arith.cmpf ogt, %26, %27 : vector<2x1000xf32>
    %cst_13 = arith.constant 1.000000e-01 : f32
    %29 = vector.broadcast %cst_13 : f32 to vector<2x1000xf32>
    %30 = arith.mulf %29, %26 : vector<2x1000xf32>
    %31 = arith.select %28, %26, %30 : vector<2x1000xi1>, vector<2x1000xf32>
    %c0_14 = arith.constant 0 : index
    %c0_15 = arith.constant 0 : index
    %32 = vector.load %arg4[%c0_14, %c0_15] : memref<1000x32xf32, #tpu.memory_space<vmem>>, vector<1000x32xf32>
    %cst_16 = arith.constant dense<0.000000e+00> : vector<2x32xf32>
    %33 = tpu.matmul %31, %32, %cst_16 {dimension_numbers = #tpu.dot_dimension_numbers<[1], [0], [0], [1], [0, 0, 1, 1], [], []>} : vector<2x1000xf32>, vector<1000x32xf32>, vector<2x32xf32> -> vector<2x32xf32>
    %34 = arith.mulf %33, %33 : vector<2x32xf32>
    %cst_17 = arith.constant dense<0.000000e+00> : vector<2xf32>
    %35 = vector.multi_reduction <add>, %34, %cst_17 [1] : vector<2x32xf32> to vector<2xf32>
    %36 = vector.shape_cast %35 : vector<2xf32> to vector<2x1xf32>
    %cst_18 = arith.constant 1.000000e-24 : f32
    %37 = vector.broadcast %cst_18 : f32 to vector<2x1xf32>
    %38 = arith.maximumf %36, %37 : vector<2x1xf32>
    %39 = math.rsqrt %38 : vector<2x1xf32>
    %40 = vector.broadcast %39 : vector<2x1xf32> to vector<2x32xf32>
    %41 = arith.mulf %33, %40 : vector<2x32xf32>
    %c0_19 = arith.constant 0 : index
    %c0_20 = arith.constant 0 : index
    %42 = vector.load %arg5[%c0_19, %c0_20] : memref<32x22xf32, #tpu.memory_space<vmem>>, vector<32x22xf32>
    %cst_21 = arith.constant dense<0.000000e+00> : vector<2x22xf32>
    %43 = tpu.matmul %41, %42, %cst_21 {dimension_numbers = #tpu.dot_dimension_numbers<[1], [0], [0], [1], [0, 0, 1, 1], [], []>} : vector<2x32xf32>, vector<32x22xf32>, vector<2x22xf32> -> vector<2x22xf32>
    %cst_22 = arith.constant 1.000000e-01 : f32
    %44 = vector.broadcast %cst_22 : f32 to vector<2x22xf32>
    %45 = arith.mulf %44, %43 : vector<2x22xf32>
    %46 = arith.mulf %45, %45 : vector<2x22xf32>
    %cst_23 = arith.constant 1.000000e+00 : f32
    %47 = vector.broadcast %cst_23 : f32 to vector<2x22xf32>
    %48 = arith.subf %47, %46 : vector<2x22xf32>
    %cst_24 = arith.constant 0.000000e+00 : f32
    %49 = vector.broadcast %cst_24 : f32 to vector<2x22xf32>
    %50 = arith.maximumf %48, %49 : vector<2x22xf32>
    %51 = math.sqrt %50 : vector<2x22xf32>
    %52 = math.exp %43 : vector<2x22xf32>
    %cst_25 = arith.constant 0.540302277 : f32
    %53 = vector.broadcast %cst_25 : f32 to vector<2x22xf32>
    %54 = arith.mulf %43, %53 : vector<2x22xf32>
    %cst_26 = arith.constant 8.414710e+00 : f32
    %55 = vector.broadcast %cst_26 : f32 to vector<2x22xf32>
    %56 = arith.mulf %55, %51 : vector<2x22xf32>
    %57 = arith.subf %54, %56 : vector<2x22xf32>
    %58 = math.exp %57 : vector<2x22xf32>
    %cst_27 = arith.constant dense<0.000000e+00> : vector<2xf32>
    %59 = vector.multi_reduction <add>, %52, %cst_27 [1] : vector<2x22xf32> to vector<2xf32>
    %60 = vector.shape_cast %59 : vector<2xf32> to vector<2x1xf32>
    %61 = vector.broadcast %60 : vector<2x1xf32> to vector<2x22xf32>
    %62 = arith.subf %61, %52 : vector<2x22xf32>
    %63 = arith.addf %62, %58 : vector<2x22xf32>
    %64 = tpu.reciprocal %63 {approx = true} : vector<2x22xf32> -> vector<2x22xf32>
    %65 = arith.mulf %58, %64 : vector<2x22xf32>
    %cst_28 = arith.constant 0.000000e+00 : f32
    %66 = vector.broadcast %cst_28 : f32 to vector<2x74xf32>
    %67 = tpu.concatenate %33, %65, %66 in 1 : vector<2x32xf32>, vector<2x22xf32>, vector<2x74xf32> -> vector<2x128xf32>
    %c0_29 = arith.constant 0 : index
    %c0_30 = arith.constant 0 : index
    %68 = vector.load %arg6[%c0_29, %c0_30] : memref<2x128xf32, #tpu.memory_space<vmem>>, vector<2x128xf32>
    tpu.vector_store %arg6[%c0_29, %c0_30], %67 {strides = array<i32>} : memref<2x128xf32, #tpu.memory_space<vmem>>, vector<2x128xf32>,
    return
  }
}

</mosaic_0001>

<llo_original>
// kernel: tpu_custom_call.1
$region0: #{tpu_custom_call.1}
  #allocation0 [shape = 'u32[]', space=smem, size = 0x4, offset = 0x4, fixed_abs, tag = 'smem constant byte address 0x4 - core index']
  #allocation1 [shape = 'u32[144,128]{1,0:T(1,128)}', space=vmem, size = 0x12000, scoped, tag = 'internal scratch']
  %s0 = inlined_call_operand.vmem [shape: f32[2,4], index: 0, kind: input, shape index: {}]
  %s1 = inlined_call_operand.vmem [shape: f32[4,1000], index: 1, kind: input, shape index: {}]
  %s2 = inlined_call_operand.vmem [shape: f32[1,1000], index: 2, kind: input, shape index: {}]
  %s3 = inlined_call_operand.vmem [shape: f32[1,1000], index: 3, kind: input, shape index: {}]
  %s4 = inlined_call_operand.vmem [shape: f32[1000,32], index: 4, kind: input, shape index: {}]
  %s5 = inlined_call_operand.vmem [shape: f32[32,22], index: 5, kind: input, shape index: {}]
  %s6 = inlined_call_operand.hbm [shape: f32[2,128], index: 6, kind: output, shape index: {}]
  %s7 = sld [smem:[#allocation0]]
  $region34: #{tpu_custom_call.1} parent=0
    _
  %s9 = ssub.s32 1, %s7
  %s10 = scalar_select 0, %s9, %s7
  $region1: #{tpu_custom_call.1} parent=0
    #allocation2 [shape = 'u8[1024]{0}', space=vmem, size = 0x400, scoped, tag = 'output window, operand 0, single buffered']
    #allocation3 [shape = 's32[1]{0}', space=sflag, size = 0x4, scoped, tag = 'scoped memory for tpu_custom_call.1']
    %11 = vsyncpa [#allocation3], 0
    // Predicated region
    $region2: #{tpu_custom_call.1} parent=1 // pred_check
      _
    $region3: #{tpu_custom_call.1} parent=1 // pred_check_branch
      %13 = sbr.rel (0) target = $region5
    $region4: #{tpu_custom_call.1} parent=1 // pred_region
      _
    $region5: #{tpu_custom_call.1} parent=1 // pred_fallthru
      _
    // Predicated region
    $region6: #{tpu_custom_call.1} parent=1 // pred_check
      _
    $region7: #{tpu_custom_call.1} parent=1 // pred_check_branch
      %15 = sbr.rel (0) target = $region9
    $region8: #{tpu_custom_call.1} parent=1 // pred_region
      _
    $region9: #{tpu_custom_call.1} parent=1 // pred_fallthru
      _
    // Predicated region
    $region10: #{tpu_custom_call.1} parent=1 // pred_check
      _
    $region11: #{tpu_custom_call.1} parent=1 // pred_check_branch
      %17 = sbr.rel (0) target = $region13
    $region12: #{tpu_custom_call.1} parent=1 // pred_region
      _
    $region13: #{tpu_custom_call.1} parent=1 // pred_fallthru
      _
    // Predicated region
    $region14: #{tpu_custom_call.1} parent=1 // pred_check
      _
    $region15: #{tpu_custom_call.1} parent=1 // pred_check_branch
      %19 = sbr.rel (0) target = $region17
    $region16: #{tpu_custom_call.1} parent=1 // pred_region
      _
    $region17: #{tpu_custom_call.1} parent=1 // pred_fallthru
      _
    // Predicated region
    $region18: #{tpu_custom_call.1} parent=1 // pred_check
      _
    $region19: #{tpu_custom_call.1} parent=1 // pred_check_branch
      %21 = sbr.rel (0) target = $region21
    $region20: #{tpu_custom_call.1} parent=1 // pred_region
      _
    $region21: #{tpu_custom_call.1} parent=1 // pred_fallthru
      _
    // Predicated region
    $region22: #{tpu_custom_call.1} parent=1 // pred_check
      _
    $region23: #{tpu_custom_call.1} parent=1 // pred_check_branch
      %23 = sbr.rel (0) target = $region25
    $region24: #{tpu_custom_call.1} parent=1 // pred_region
      _
    $region25: #{tpu_custom_call.1} parent=1 // pred_fallthru
      _
    %v24 = vld [vmem:[%s0] sm:$0x3]
    %v25 = vld [vmem:[%s1] sm:$0xff]
    %v26 = vld [vmem:[%s1 + $0x8] sm:$0xff]
    %v27 = vld [vmem:[%s1 + $0x10] sm:$0xff]
    %v28 = vld [vmem:[%s1 + $0x18] sm:$0xff]
    %v33 = vcombine.high %v25, %v25
    %v34 = vcombine.high %v26, %v26
    %v35 = vcombine.high %v27, %v27
    %v36 = vcombine.high %v28, %v28
    %vm37 = vcmask 31744
    %v39 = vsel %vm37, %v24, 0
    %vm41 = vcmask 1043456
    %v42 = vsel %vm41, %v25, 0
    %v44 = vsel %vm41, %v33, 0
    %v46 = vsel %vm41, %v26, 0
    %v48 = vsel %vm41, %v34, 0
    %v50 = vsel %vm41, %v27, 0
    %v52 = vsel %vm41, %v35, 0
    %v54 = vsel %vm41, %v28, 0
    %v56 = vsel %vm41, %v36, 0
    %58 = vmatprep.subr.mxu0 0.0
    %59 = vmatpush1.msra.mxu0 0.0
    %60 = vmatprep.subr.mxu0 0.0
    %61 = vmatpush1.msra.mxu0 0.0
    %62 = vmatprep.subr.mxu0 0.0
    %63 = vmatpush1.msra.mxu0 0.0
    %64 = vmatprep.subr.mxu0 0.0
    %65 = vmatpush1.msra.mxu0 0.0
    %66 = vmatprep.subr.mxu0 0.0
    %67 = vmatpush1.msra.mxu0 0.0
    %68 = vmatprep.subr.mxu0 0.0
    %69 = vmatpush1.msra.mxu0 0.0
    %70 = vmatprep.subr.mxu0 0.0
    %71 = vmatpush1.msra.mxu0 0.0
    %72 = vmatprep.subr.mxu0 0.0
    %73 = vmatpush1.msra.mxu0 0.0
    %74 = vmatprep.subr.mxu0 0.0
    %75 = vmatpush1.msra.mxu0 0.0
    %76 = vmatprep.subr.mxu0 0.0
    %77 = vmatpush1.msra.mxu0 0.0
    %78 = vmatprep.subr.mxu0 0.0
    %79 = vmatpush1.msra.mxu0 0.0
    %80 = vmatprep.subr.mxu0 0.0
    %81 = vmatpush1.msra.mxu0 0.0
    %82 = vmatprep.subr.mxu0 0.0
    %83 = vmatpush1.msra.mxu0 0.0
    %84 = vmatprep.subr.mxu0 0.0
    %85 = vmatpush1.msra.mxu0 0.0
    %86 = vmatprep.subr.mxu0 0.0
    %87 = vmatpush1.msra.mxu0 0.0
    %88 = vmatprep.subr.mxu0 %v44
    %89 = vmatpush1.msra.mxu0 %v42
    %90 = vmatprep.subr.mxu0 0.0
    %91 = vmatpush2.msra.mxu0 0.0
    %92 = vmatprep.subr.mxu0 0.0
    %93 = vmatpush2.msra.mxu0 0.0
    %94 = vmatprep.subr.mxu0 0.0
    %95 = vmatpush2.msra.mxu0 0.0
    %96 = vmatprep.subr.mxu0 0.0
    %97 = vmatpush2.msra.mxu0 0.0
    %98 = vmatprep.subr.mxu0 0.0
    %99 = vmatpush2.msra.mxu0 0.0
    %100 = vmatprep.subr.mxu0 0.0
    %101 = vmatpush2.msra.mxu0 0.0
    %102 = vmatprep.subr.mxu0 0.0
    %103 = vmatpush2.msra.mxu0 0.0
    %104 = vmatprep.subr.mxu0 0.0
    %105 = vmatpush2.msra.mxu0 0.0
    %106 = vmatprep.subr.mxu0 0.0
    %107 = vmatpush2.msra.mxu0 0.0
    %108 = vmatprep.subr.mxu0 0.0
    %109 = vmatpush2.msra.mxu0 0.0
    %110 = vmatprep.subr.mxu0 0.0
    %111 = vmatpush2.msra.mxu0 0.0
    %112 = vmatprep.subr.mxu0 0.0
    %113 = vmatpush2.msra.mxu0 0.0
    %114 = vmatprep.subr.mxu0 0.0
    %115 = vmatpush2.msra.mxu0 0.0
    %116 = vmatprep.subr.mxu0 0.0
    %117 = vmatpush2.msra.mxu0 0.0
    %118 = vmatprep.subr.mxu0 0.0
    %119 = vmatpush2.msra.mxu0 0.0
    %120 = vmatprep.subr.mxu0 0.0
    %121 = vmatpush2.msra.mxu0 0.0
    %122 = vmatprep.mubr.f32.mxu0 0.0
    %123 = vmatmul.mubr.f32.gmra.mxu0 %v39
    %v124 = vpop.f32.mrf.mxu0
    %v125 = vadd.f32 0.0, %v124
    %v126 = vpop.f32.mrf.mxu0
    %v127 = vadd.f32 0.0, %v126
    %128 = vdwg.mxu0
    %129 = vmatprep.subr.mxu0 0.0
    %130 = vmatpush1.msra.mxu0 0.0
    %131 = vmatprep.subr.mxu0 0.0
    %132 = vmatpush1.msra.mxu0 0.0
    %133 = vmatprep.subr.mxu0 0.0
    %134 = vmatpush1.msra.mxu0 0.0
    %135 = vmatprep.subr.mxu0 0.0
    %136 = vmatpush1.msra.mxu0 0.0
    %137 = vmatprep.subr.mxu0 0.0
    %138 = vmatpush1.msra.mxu0 0.0
    %139 = vmatprep.subr.mxu0 0.0
    %140 = vmatpush1.msra.mxu0 0.0
    %141 = vmatprep.subr.mxu0 0.0
    %142 = vmatpush1.msra.mxu0 0.0
    %143 = vmatprep.subr.mxu0 0.0
    %144 = vmatpush1.msra.mxu0 0.0
    %145 = vmatprep.subr.mxu0 0.0
    %146 = vmatpush1.msra.mxu0 0.0
    %147 = vmatprep.subr.mxu0 0.0
    %148 = vmatpush1.msra.mxu0 0.0
    %149 = vmatprep.subr.mxu0 0.0
    %150 = vmatpush1.msra.mxu0 0.0
    %151 = vmatprep.subr.mxu0 0.0
    %152 = vmatpush1.msra.mxu0 0.0
    %153 = vmatprep.subr.mxu0 0.0
    %154 = vmatpush1.msra.mxu0 0.0
    %155 = vmatprep.subr.mxu0 0.0
    %156 = vmatpush1.msra.mxu0 0.0
    %157 = vmatprep.subr.mxu0 0.0
    %158 = vmatpush1.msra.mxu0 0.0
    %159 = vmatprep.subr.mxu0 %v48
    %160 = vmatpush1.msra.mxu0 %v46
    %161 = vmatprep.subr.mxu0 0.0
    %162 = vmatpush2.msra.mxu0 0.0
    %163 = vmatprep.subr.mxu0 0.0
    %164 = vmatpush2.msra.mxu0 0.0
    %165 = vmatprep.subr.mxu0 0.0
    %166 = vmatpush2.msra.mxu0 0.0
    %167 = vmatprep.subr.mxu0 0.0
    %168 = vmatpush2.msra.mxu0 0.0
    %169 = vmatprep.subr.mxu0 0.0
    %170 = vmatpush2.msra.mxu0 0.0
    %171 = vmatprep.subr.mxu0 0.0
    %172 = vmatpush2.msra.mxu0 0.0
    %173 = vmatprep.subr.mxu0 0.0
    %174 = vmatpush2.msra.mxu0 0.0
    %175 = vmatprep.subr.mxu0 0.0
    %176 = vmatpush2.msra.mxu0 0.0
    %177 = vmatprep.subr.mxu0 0.0
    %178 = vmatpush2.msra.mxu0 0.0
    %179 = vmatprep.subr.mxu0 0.0
    %180 = vmatpush2.msra.mxu0 0.0
    %181 = vmatprep.subr.mxu0 0.0
    %182 = vmatpush2.msra.mxu0 0.0
    %183 = vmatprep.subr.mxu0 0.0
    %184 = vmatpush2.msra.mxu0 0.0
    %185 = vmatprep.subr.mxu0 0.0
    %186 = vmatpush2.msra.mxu0 0.0
    %187 = vmatprep.subr.mxu0 0.0
    %188 = vmatpush2.msra.mxu0 0.0
    %189 = vmatprep.subr.mxu0 0.0
    %190 = vmatpush2.msra.mxu0 0.0
    %191 = vmatprep.subr.mxu0 0.0
    %192 = vmatpush2.msra.mxu0 0.0
    %193 = vmatprep.mubr.f32.mxu0 0.0
    %194 = vmatmul.mubr.f32.gmra.mxu0 %v39
    %v195 = vpop.f32.mrf.mxu0
    %v196 = vadd.f32 0.0, %v195
    %v197 = vpop.f32.mrf.mxu0
    %v198 = vadd.f32 0.0, %v197
    %199 = vdwg.mxu0
    %200 = vmatprep.subr.mxu0 0.0
    %201 = vmatpush1.msra.mxu0 0.0
    %202 = vmatprep.subr.mxu0 0.0
    %203 = vmatpush1.msra.mxu0 0.0
    %204 = vmatprep.subr.mxu0 0.0
    %205 = vmatpush1.msra.mxu0 0.0
    %206 = vmatprep.subr.mxu0 0.0
    %207 = vmatpush1.msra.mxu0 0.0
    %208 = vmatprep.subr.mxu0 0.0
    %209 = vmatpush1.msra.mxu0 0.0
    %210 = vmatprep.subr.mxu0 0.0
    %211 = vmatpush1.msra.mxu0 0.0
    %212 = vmatprep.subr.mxu0 0.0
    %213 = vmatpush1.msra.mxu0 0.0
    %214 = vmatprep.subr.mxu0 0.0
    %215 = vmatpush1.msra.mxu0 0.0
    %216 = vmatprep.subr.mxu0 0.0
    %217 = vmatpush1.msra.mxu0 0.0
    %218 = vmatprep.subr.mxu0 0.0
    %219 = vmatpush1.msra.mxu0 0.0
    %220 = vmatprep.subr.mxu0 0.0
    %221 = vmatpush1.msra.mxu0 0.0
    %222 = vmatprep.subr.mxu0 0.0
    %223 = vmatpush1.msra.mxu0 0.0
    %224 = vmatprep.subr.mxu0 0.0
    %225 = vmatpush1.msra.mxu0 0.0
    %226 = vmatprep.subr.mxu0 0.0
    %227 = vmatpush1.msra.mxu0 0.0
    %228 = vmatprep.subr.mxu0 0.0
    %229 = vmatpush1.msra.mxu0 0.0
    %230 = vmatprep.subr.mxu0 %v52
    %231 = vmatpush1.msra.mxu0 %v50
    %232 = vmatprep.subr.mxu0 0.0
    %233 = vmatpush2.msra.mxu0 0.0
    %234 = vmatprep.subr.mxu0 0.0
    %235 = vmatpush2.msra.mxu0 0.0
    %236 = vmatprep.subr.mxu0 0.0
    %237 = vmatpush2.msra.mxu0 0.0
    %238 = vmatprep.subr.mxu0 0.0
    %239 = vmatpush2.msra.mxu0 0.0
    %240 = vmatprep.subr.mxu0 0.0
    %241 = vmatpush2.msra.mxu0 0.0
    %242 = vmatprep.subr.mxu0 0.0
    %243 = vmatpush2.msra.mxu0 0.0
    %244 = vmatprep.subr.mxu0 0.0
    %245 = vmatpush2.msra.mxu0 0.0
    %246 = vmatprep.subr.mxu0 0.0
    %247 = vmatpush2.msra.mxu0 0.0
    %248 = vmatprep.subr.mxu0 0.0
    %249 = vmatpush2.msra.mxu0 0.0
    %250 = vmatprep.subr.mxu0 0.0
    %251 = vmatpush2.msra.mxu0 0.0
    %252 = vmatprep.subr.mxu0 0.0
    %253 = vmatpush2.msra.mxu0 0.0
    %254 = vmatprep.subr.mxu0 0.0
    %255 = vmatpush2.msra.mxu0 0.0
    %256 = vmatprep.subr.mxu0 0.0
    %257 = vmatpush2.msra.mxu0 0.0
    %258 = vmatprep.subr.mxu0 0.0
    %259 = vmatpush2.msra.mxu0 0.0
    %260 = vmatprep.subr.mxu0 0.0
    %261 = vmatpush2.msra.mxu0 0.0
    %262 = vmatprep.subr.mxu0 0.0
    %263 = vmatpush2.msra.mxu0 0.0
    %264 = vmatprep.mubr.f32.mxu0 0.0
    %265 = vmatmul.mubr.f32.gmra.mxu0 %v39
    %v266 = vpop.f32.mrf.mxu0
    %v267 = vadd.f32 0.0, %v266
    %v268 = vpop.f32.mrf.mxu0
    %v269 = vadd.f32 0.0, %v268
    %270 = vdwg.mxu0
    %271 = vmatprep.subr.mxu0 0.0
    %272 = vmatpush1.msra.mxu0 0.0
    %273 = vmatprep.subr.mxu0 0.0
    %274 = vmatpush1.msra.mxu0 0.0
    %275 = vmatprep.subr.mxu0 0.0
    %276 = vmatpush1.msra.mxu0 0.0
    %277 = vmatprep.subr.mxu0 0.0
    %278 = vmatpush1.msra.mxu0 0.0
    %279 = vmatprep.subr.mxu0 0.0
    %280 = vmatpush1.msra.mxu0 0.0
    %281 = vmatprep.subr.mxu0 0.0
    %282 = vmatpush1.msra.mxu0 0.0
    %283 = vmatprep.subr.mxu0 0.0
    %284 = vmatpush1.msra.mxu0 0.0
    %285 = vmatprep.subr.mxu0 0.0
    %286 = vmatpush1.msra.mxu0 0.0
    %287 = vmatprep.subr.mxu0 0.0
    %288 = vmatpush1.msra.mxu0 0.0
    %289 = vmatprep.subr.mxu0 0.0
    %290 = vmatpush1.msra.mxu0 0.0
    %291 = vmatprep.subr.mxu0 0.0
    %292 = vmatpush1.msra.mxu0 0.0
    %293 = vmatprep.subr.mxu0 0.0
    %294 = vmatpush1.msra.mxu0 0.0
    %295 = vmatprep.subr.mxu0 0.0
    %296 = vmatpush1.msra.mxu0 0.0
    %297 = vmatprep.subr.mxu0 0.0
    %298 = vmatpush1.msra.mxu0 0.0
    %299 = vmatprep.subr.mxu0 0.0
    %300 = vmatpush1.msra.mxu0 0.0
    %301 = vmatprep.subr.mxu0 %v56
    %302 = vmatpush1.msra.mxu0 %v54
    %303 = vmatprep.subr.mxu0 0.0
    %304 = vmatpush2.msra.mxu0 0.0
    %305 = vmatprep.subr.mxu0 0.0
    %306 = vmatpush2.msra.mxu0 0.0
    %307 = vmatprep.subr.mxu0 0.0
    %308 = vmatpush2.msra.mxu0 0.0
    %309 = vmatprep.subr.mxu0 0.0
    %310 = vmatpush2.msra.mxu0 0.0
    %311 = vmatprep.subr.mxu0 0.0
    %312 = vmatpush2.msra.mxu0 0.0
    %313 = vmatprep.subr.mxu0 0.0
    %314 = vmatpush2.msra.mxu0 0.0
    %315 = vmatprep.subr.mxu0 0.0
    %316 = vmatpush2.msra.mxu0 0.0
    %317 = vmatprep.subr.mxu0 0.0
    %318 = vmatpush2.msra.mxu0 0.0
    %319 = vmatprep.subr.mxu0 0.0
    %320 = vmatpush2.msra.mxu0 0.0
    %321 = vmatprep.subr.mxu0 0.0
    %322 = vmatpush2.msra.mxu0 0.0
    %323 = vmatprep.subr.mxu0 0.0
    %324 = vmatpush2.msra.mxu0 0.0
    %325 = vmatprep.subr.mxu0 0.0
    %326 = vmatpush2.msra.mxu0 0.0
    %327 = vmatprep.subr.mxu0 0.0
    %328 = vmatpush2.msra.mxu0 0.0
    %329 = vmatprep.subr.mxu0 0.0
    %330 = vmatpush2.msra.mxu0 0.0
    %331 = vmatprep.subr.mxu0 0.0
    %332 = vmatpush2.msra.mxu0 0.0
    %333 = vmatprep.subr.mxu0 0.0
    %334 = vmatpush2.msra.mxu0 0.0
    %335 = vmatprep.mubr.f32.mxu0 0.0
    %336 = vmatmul.mubr.f32.gmra.mxu0 %v39
    %v337 = vpop.f32.mrf.mxu0
    %v338 = vadd.f32 0.0, %v337
    %v339 = vpop.f32.mrf.mxu0
    %v340 = vadd.f32 0.0, %v339
    %341 = vdwg.mxu0
    %vm342 = vcmask 1041408
    %v343 = vsel %vm342, %v125, 0.0
    %v344 = vrot.slane %v343, 4
    %v345 = vadd.f32 %v343, %v344
    %v346 = vrot.slane %v345, 2
    %v347 = vadd.f32 %v345, %v346
    %v348 = vrot.slane %v347, 1
    %v349 = vadd.f32 %v347, %v348
    %v350 = vsel %vm342, %v127, 0.0
    %v351 = vrot.slane %v350, 4
    %v352 = vadd.f32 %v350, %v351
    %v353 = vrot.slane %v352, 2
    %v354 = vadd.f32 %v352, %v353
    %v355 = vrot.slane %v354, 1
    %v356 = vadd.f32 %v354, %v355
    %v357 = vsel %vm342, %v196, 0.0
    %v358 = vrot.slane %v357, 4
    %v359 = vadd.f32 %v357, %v358
    %v360 = vrot.slane %v359, 2
    %v361 = vadd.f32 %v359, %v360
    %v362 = vrot.slane %v361, 1
    %v363 = vadd.f32 %v361, %v362
    %v364 = vsel %vm342, %v198, 0.0
    %v365 = vrot.slane %v364, 4
    %v366 = vadd.f32 %v364, %v365
    %v367 = vrot.slane %v366, 2
    %v368 = vadd.f32 %v366, %v367
    %v369 = vrot.slane %v368, 1
    %v370 = vadd.f32 %v368, %v369
    %v371 = vsel %vm342, %v267, 0.0
    %v372 = vrot.slane %v371, 4
    %v373 = vadd.f32 %v371, %v372
    %v374 = vrot.slane %v373, 2
    %v375 = vadd.f32 %v373, %v374
    %v376 = vrot.slane %v375, 1
    %v377 = vadd.f32 %v375, %v376
    %v378 = vsel %vm342, %v269, 0.0
    %v379 = vrot.slane %v378, 4
    %v380 = vadd.f32 %v378, %v379
    %v381 = vrot.slane %v380, 2
    %v382 = vadd.f32 %v380, %v381
    %v383 = vrot.slane %v382, 1
    %v384 = vadd.f32 %v382, %v383
    %v385 = vsel %vm342, %v338, 0.0
    %v386 = vrot.slane %v385, 4
    %v387 = vadd.f32 %v385, %v386
    %v388 = vrot.slane %v387, 2
    %v389 = vadd.f32 %v387, %v388
    %v390 = vrot.slane %v389, 1
    %v391 = vadd.f32 %v389, %v390
    %vm392 = vcmask 844800
    %v393 = vsel %vm392, %v340, 0.0
    %v394 = vrot.slane %v393, 4
    %v395 = vadd.f32 %v393, %v394
    %v396 = vrot.slane %v395, 2
    %v397 = vadd.f32 %v395, %v396
    %v398 = vrot.slane %v397, 1
    %v399 = vadd.f32 %v397, %v398
    %v400 = vrcp.pop 2.0
    %v401 = vmul.f32 %v349, %v400
    %v402 = vmul.f32 %v356, %v400
    %v403 = vmul.f32 %v363, %v400
    %v404 = vmul.f32 %v370, %v400
    %v405 = vmul.f32 %v377, %v400
    %v406 = vmul.f32 %v384, %v400
    %v407 = vmul.f32 %v391, %v400
    %v408 = vmul.f32 %v399, %v400
    %v409 = vsub.f32 %v125, %v401
    %v410 = vsub.f32 %v127, %v402
    %v411 = vsub.f32 %v196, %v403
    %v412 = vsub.f32 %v198, %v404
    %v413 = vsub.f32 %v267, %v405
    %v414 = vsub.f32 %v269, %v406
    %v415 = vsub.f32 %v338, %v407
    %v416 = vsub.f32 %v340, %v408
    %v417 = vmul.f32 %v409, %v409
    %v418 = vmul.f32 %v410, %v410
    %v419 = vmul.f32 %v411, %v411
    %v420 = vmul.f32 %v412, %v412
    %v421 = vmul.f32 %v413, %v413
    %v422 = vmul.f32 %v414, %v414
    %v423 = vmul.f32 %v415, %v415
    %v424 = vmul.f32 %v416, %v416
    %v425 = vsel %vm342, %v417, 0.0
    %v426 = vrot.slane %v425, 4
    %v427 = vadd.f32 %v425, %v426
    %v428 = vrot.slane %v427, 2
    %v429 = vadd.f32 %v427, %v428
    %v430 = vrot.slane %v429, 1
    %v431 = vadd.f32 %v429, %v430
    %v432 = vsel %vm342, %v418, 0.0
    %v433 = vrot.slane %v432, 4
    %v434 = vadd.f32 %v432, %v433
    %v435 = vrot.slane %v434, 2
    %v436 = vadd.f32 %v434, %v435
    %v437 = vrot.slane %v436, 1
    %v438 = vadd.f32 %v436, %v437
    %v439 = vsel %vm342, %v419, 0.0
    %v440 = vrot.slane %v439, 4
    %v441 = vadd.f32 %v439, %v440
    %v442 = vrot.slane %v441, 2
    %v443 = vadd.f32 %v441, %v442
    %v444 = vrot.slane %v443, 1
    %v445 = vadd.f32 %v443, %v444
    %v446 = vsel %vm342, %v420, 0.0
    %v447 = vrot.slane %v446, 4
    %v448 = vadd.f32 %v446, %v447
    %v449 = vrot.slane %v448, 2
    %v450 = vadd.f32 %v448, %v449
    %v451 = vrot.slane %v450, 1
    %v452 = vadd.f32 %v450, %v451
    %v453 = vsel %vm342, %v421, 0.0
    %v454 = vrot.slane %v453, 4
    %v455 = vadd.f32 %v453, %v454
    %v456 = vrot.slane %v455, 2
    %v457 = vadd.f32 %v455, %v456
    %v458 = vrot.slane %v457, 1
    %v459 = vadd.f32 %v457, %v458
    %v460 = vsel %vm342, %v422, 0.0
    %v461 = vrot.slane %v460, 4
    %v462 = vadd.f32 %v460, %v461
    %v463 = vrot.slane %v462, 2
    %v464 = vadd.f32 %v462, %v463
    %v465 = vrot.slane %v464, 1
    %v466 = vadd.f32 %v464, %v465
    %v467 = vsel %vm342, %v423, 0.0
    %v468 = vrot.slane %v467, 4
    %v469 = vadd.f32 %v467, %v468
    %v470 = vrot.slane %v469, 2
    %v471 = vadd.f32 %v469, %v470
    %v472 = vrot.slane %v471, 1
    %v473 = vadd.f32 %v471, %v472
    %v474 = vsel %vm392, %v424, 0.0
    %v475 = vrot.slane %v474, 4
    %v476 = vadd.f32 %v474, %v475
    %v477 = vrot.slane %v476, 2
    %v478 = vadd.f32 %v476, %v477
    %v479 = vrot.slane %v478, 1
    %v480 = vadd.f32 %v478, %v479
    %v481 = vmul.f32 %v431, %v400
    %v482 = vmul.f32 %v438, %v400
    %v483 = vmul.f32 %v445, %v400
    %v484 = vmul.f32 %v452, %v400
    %v485 = vmul.f32 %v459, %v400
    %v486 = vmul.f32 %v466, %v400
    %v487 = vmul.f32 %v473, %v400
    %v488 = vmul.f32 %v480, %v400
    %v489 = vadd.f32 %v481, 1e-05
    %v490 = vadd.f32 %v482, 1e-05
    %v491 = vadd.f32 %v483, 1e-05
    %v492 = vadd.f32 %v484, 1e-05
    %v493 = vadd.f32 %v485, 1e-05
    %v494 = vadd.f32 %v486, 1e-05
    %v495 = vadd.f32 %v487, 1e-05
    %v496 = vadd.f32 %v488, 1e-05
    %v497 = vrsqrt.pop %v489
    %v498 = vrsqrt.pop %v490
    %v499 = vrsqrt.pop %v491
    %v500 = vrsqrt.pop %v492
    %v501 = vrsqrt.pop %v493
    %v502 = vrsqrt.pop %v494
    %v503 = vrsqrt.pop %v495
    %v504 = vrsqrt.pop %v496
    %v505 = vmul.f32 %v409, %v497
    %v506 = vmul.f32 %v410, %v498
    %v507 = vmul.f32 %v411, %v499
    %v508 = vmul.f32 %v412, %v500
    %v509 = vmul.f32 %v413, %v501
    %v510 = vmul.f32 %v414, %v502
    %v511 = vmul.f32 %v415, %v503
    %v512 = vmul.f32 %v416, %v504
    %v513 = vld [vmem:[%s2] sm:$0xff]
    %v515 = vlaneseq
    %v516 = vshrl.u32 %v515, 7
    %v517 = vsub.s32 0, %v516
    %v518 = vrot.slane %v513, %v517
    %v519 = vlaneseq
    %v520 = vshrl.u32 %v519, 7
    %v521 = vsub.s32 1, %v520
    %v522 = vrot.slane %v513, %v521
    %v523 = vlaneseq
    %v524 = vshrl.u32 %v523, 7
    %v525 = vsub.s32 2, %v524
    %v526 = vrot.slane %v513, %v525
    %v527 = vlaneseq
    %v528 = vshrl.u32 %v527, 7
    %v529 = vsub.s32 3, %v528
    %v530 = vrot.slane %v513, %v529
    %v531 = vlaneseq
    %v532 = vshrl.u32 %v531, 7
    %v533 = vsub.s32 4, %v532
    %v534 = vrot.slane %v513, %v533
    %v535 = vlaneseq
    %v536 = vshrl.u32 %v535, 7
    %v537 = vsub.s32 5, %v536
    %v538 = vrot.slane %v513, %v537
    %v539 = vlaneseq
    %v540 = vshrl.u32 %v539, 7
    %v541 = vsub.s32 6, %v540
    %v542 = vrot.slane %v513, %v541
    %v543 = vlaneseq
    %v544 = vshrl.u32 %v543, 7
    %v545 = vsub.s32 7, %v544
    %v546 = vrot.slane %v513, %v545
    %v555 = vmul.f32 %v505, %v518
    %v556 = vmul.f32 %v506, %v522
    %v557 = vmul.f32 %v507, %v526
    %v558 = vmul.f32 %v508, %v530
    %v559 = vmul.f32 %v509, %v534
    %v560 = vmul.f32 %v510, %v538
    %v561 = vmul.f32 %v511, %v542
    %v562 = vmul.f32 %v512, %v546
    %v563 = vld [vmem:[%s3] sm:$0xff]
    %v565 = vlaneseq
    %v566 = vshrl.u32 %v565, 7
    %v567 = vsub.s32 0, %v566
    %v568 = vrot.slane %v563, %v567
    %v569 = vlaneseq
    %v570 = vshrl.u32 %v569, 7
    %v571 = vsub.s32 1, %v570
    %v572 = vrot.slane %v563, %v571
    %v573 = vlaneseq
    %v574 = vshrl.u32 %v573, 7
    %v575 = vsub.s32 2, %v574
    %v576 = vrot.slane %v563, %v575
    %v577 = vlaneseq
    %v578 = vshrl.u32 %v577, 7
    %v579 = vsub.s32 3, %v578
    %v580 = vrot.slane %v563, %v579
    %v581 = vlaneseq
    %v582 = vshrl.u32 %v581, 7
    %v583 = vsub.s32 4, %v582
    %v584 = vrot.slane %v563, %v583
    %v585 = vlaneseq
    %v586 = vshrl.u32 %v585, 7
    %v587 = vsub.s32 5, %v586
    %v588 = vrot.slane %v563, %v587
    %v589 = vlaneseq
    %v590 = vshrl.u32 %v589, 7
    %v591 = vsub.s32 6, %v590
    %v592 = vrot.slane %v563, %v591
    %v593 = vlaneseq
    %v594 = vshrl.u32 %v593, 7
    %v595 = vsub.s32 7, %v594
    %v596 = vrot.slane %v563, %v595
    %v605 = vadd.f32 %v555, %v568
    %v606 = vadd.f32 %v556, %v572
    %v607 = vadd.f32 %v557, %v576
    %v608 = vadd.f32 %v558, %v580
    %v609 = vadd.f32 %v559, %v584
    %v610 = vadd.f32 %v560, %v588
    %v611 = vadd.f32 %v561, %v592
    %v612 = vadd.f32 %v562, %v596
    %vm613 = vcmp.gt.f32.partialorder %v605, 0.0
    %vm614 = vcmp.gt.f32.partialorder %v606, 0.0
    %vm615 = vcmp.gt.f32.partialorder %v607, 0.0
    %vm616 = vcmp.gt.f32.partialorder %v608, 0.0
    %vm617 = vcmp.gt.f32.partialorder %v609, 0.0
    %vm618 = vcmp.gt.f32.partialorder %v610, 0.0
    %vm619 = vcmp.gt.f32.partialorder %v611, 0.0
    %vm620 = vcmp.gt.f32.partialorder %v612, 0.0
    %v621 = vmul.f32 %v605, 0.1
    %v622 = vmul.f32 %v606, 0.1
    %v623 = vmul.f32 %v607, 0.1
    %v624 = vmul.f32 %v608, 0.1
    %v625 = vmul.f32 %v609, 0.1
    %v626 = vmul.f32 %v610, 0.1
    %v627 = vmul.f32 %v611, 0.1
    %v628 = vmul.f32 %v612, 0.1
    %v629 = vsel %vm613, %v605, %v621
    %v630 = vsel %vm614, %v606, %v622
    %v631 = vsel %vm615, %v607, %v623
    %v632 = vsel %vm616, %v608, %v624
    %v633 = vsel %vm617, %v609, %v625
    %v634 = vsel %vm618, %v610, %v626
    %v635 = vsel %vm619, %v611, %v627
    %v636 = vsel %vm620, %v612, %v628
    %v637 = vld [vmem:[%s4] sm:$0xff]
    %v638 = vld [vmem:[%s4 + $0x8] sm:$0xff]
    %v639 = vld [vmem:[%s4 + $0x10] sm:$0xff]
    %v640 = vld [vmem:[%s4 + $0x18] sm:$0xff]
    %v641 = vld [vmem:[%s4 + $0x20] sm:$0xff]
    %v642 = vld [vmem:[%s4 + $0x28] sm:$0xff]
    %v643 = vld [vmem:[%s4 + $0x30] sm:$0xff]
    %v644 = vld [vmem:[%s4 + $0x38] sm:$0xff]
    %v645 = vld [vmem:[%s4 + $0x40] sm:$0xff]
    %v646 = vld [vmem:[%s4 + $0x48] sm:$0xff]
    %v647 = vld [vmem:[%s4 + $0x50] sm:$0xff]
    %v648 = vld [vmem:[%s4 + $0x58] sm:$0xff]
    %v649 = vld [vmem:[%s4 + $0x60] sm:$0xff]
    %v650 = vld [vmem:[%s4 + $0x68] sm:$0xff]
    %v651 = vld [vmem:[%s4 + $0x70] sm:$0xff]
    %v652 = vld [vmem:[%s4 + $0x78] sm:$0xff]
    %v653 = vld [vmem:[%s4 + $0x80] sm:$0xff]
    %v654 = vld [vmem:[%s4 + $0x88] sm:$0xff]
    %v655 = vld [vmem:[%s4 + $0x90] sm:$0xff]
    %v656 = vld [vmem:[%s4 + $0x98] sm:$0xff]
    %v657 = vld [vmem:[%s4 + $0xa0] sm:$0xff]
    %v658 = vld [vmem:[%s4 + $0xa8] sm:$0xff]
    %v659 = vld [vmem:[%s4 + $0xb0] sm:$0xff]
    %v660 = vld [vmem:[%s4 + $0xb8] sm:$0xff]
    %v661 = vld [vmem:[%s4 + $0xc0] sm:$0xff]
    %v662 = vld [vmem:[%s4 + $0xc8] sm:$0xff]
    %v663 = vld [vmem:[%s4 + $0xd0] sm:$0xff]
    %v664 = vld [vmem:[%s4 + $0xd8] sm:$0xff]
    %v665 = vld [vmem:[%s4 + $0xe0] sm:$0xff]
    %v666 = vld [vmem:[%s4 + $0xe8] sm:$0xff]
    %v667 = vld [vmem:[%s4 + $0xf0] sm:$0xff]
    %v668 = vld [vmem:[%s4 + $0xf8] sm:$0xff]
    %v669 = vld [vmem:[%s4 + $0x100] sm:$0xff]
    %v670 = vld [vmem:[%s4 + $0x108] sm:$0xff]
    %v671 = vld [vmem:[%s4 + $0x110] sm:$0xff]
    %v672 = vld [vmem:[%s4 + $0x118] sm:$0xff]
    %v673 = vld [vmem:[%s4 + $0x120] sm:$0xff]
    %v674 = vld [vmem:[%s4 + $0x128] sm:$0xff]
    %v675 = vld [vmem:[%s4 + $0x130] sm:$0xff]
    %v676 = vld [vmem:[%s4 + $0x138] sm:$0xff]
    %v677 = vld [vmem:[%s4 + $0x140] sm:$0xff]
    %v678 = vld [vmem:[%s4 + $0x148] sm:$0xff]
    %v679 = vld [vmem:[%s4 + $0x150] sm:$0xff]
    %v680 = vld [vmem:[%s4 + $0x158] sm:$0xff]
    %v681 = vld [vmem:[%s4 + $0x160] sm:$0xff]
    %v682 = vld [vmem:[%s4 + $0x168] sm:$0xff]
    %v683 = vld [vmem:[%s4 + $0x170] sm:$0xff]
    %v684 = vld [vmem:[%s4 + $0x178] sm:$0xff]
    %v685 = vld [vmem:[%s4 + $0x180] sm:$0xff]
    %v686 = vld [vmem:[%s4 + $0x188] sm:$0xff]
    %v687 = vld [vmem:[%s4 + $0x190] sm:$0xff]
    %v688 = vld [vmem:[%s4 + $0x198] sm:$0xff]
    %v689 = vld [vmem:[%s4 + $0x1a0] sm:$0xff]
    %v690 = vld [vmem:[%s4 + $0x1a8] sm:$0xff]
    %v691 = vld [vmem:[%s4 + $0x1b0] sm:$0xff]
    %v692 = vld [vmem:[%s4 + $0x1b8] sm:$0xff]
    %v693 = vld [vmem:[%s4 + $0x1c0] sm:$0xff]
    %v694 = vld [vmem:[%s4 + $0x1c8] sm:$0xff]
    %v695 = vld [vmem:[%s4 + $0x1d0] sm:$0xff]
    %v696 = vld [vmem:[%s4 + $0x1d8] sm:$0xff]
    %v697 = vld [vmem:[%s4 + $0x1e0] sm:$0xff]
    %v698 = vld [vmem:[%s4 + $0x1e8] sm:$0xff]
    %v699 = vld [vmem:[%s4 + $0x1f0] sm:$0xff]
    %v700 = vld [vmem:[%s4 + $0x1f8] sm:$0xff]
    %v701 = vld [vmem:[%s4 + $0x200] sm:$0xff]
    %v702 = vld [vmem:[%s4 + $0x208] sm:$0xff]
    %v703 = vld [vmem:[%s4 + $0x210] sm:$0xff]
    %v704 = vld [vmem:[%s4 + $0x218] sm:$0xff]
    %v705 = vld [vmem:[%s4 + $0x220] sm:$0xff]
    %v706 = vld [vmem:[%s4 + $0x228] sm:$0xff]
    %v707 = vld [vmem:[%s4 + $0x230] sm:$0xff]
    %v708 = vld [vmem:[%s4 + $0x238] sm:$0xff]
    %v709 = vld [vmem:[%s4 + $0x240] sm:$0xff]
    %v710 = vld [vmem:[%s4 + $0x248] sm:$0xff]
    %v711 = vld [vmem:[%s4 + $0x250] sm:$0xff]
    %v712 = vld [vmem:[%s4 + $0x258] sm:$0xff]
    %v713 = vld [vmem:[%s4 + $0x260] sm:$0xff]
    %v714 = vld [vmem:[%s4 + $0x268] sm:$0xff]
    %v715 = vld [vmem:[%s4 + $0x270] sm:$0xff]
    %v716 = vld [vmem:[%s4 + $0x278] sm:$0xff]
    %v717 = vld [vmem:[%s4 + $0x280] sm:$0xff]
    %v718 = vld [vmem:[%s4 + $0x288] sm:$0xff]
    %v719 = vld [vmem:[%s4 + $0x290] sm:$0xff]
    %v720 = vld [vmem:[%s4 + $0x298] sm:$0xff]
    %v721 = vld [vmem:[%s4 + $0x2a0] sm:$0xff]
    %v722 = vld [vmem:[%s4 + $0x2a8] sm:$0xff]
    %v723 = vld [vmem:[%s4 + $0x2b0] sm:$0xff]
    %v724 = vld [vmem:[%s4 + $0x2b8] sm:$0xff]
    %v725 = vld [vmem:[%s4 + $0x2c0] sm:$0xff]
    %v726 = vld [vmem:[%s4 + $0x2c8] sm:$0xff]
    %v727 = vld [vmem:[%s4 + $0x2d0] sm:$0xff]
    %v728 = vld [vmem:[%s4 + $0x2d8] sm:$0xff]
    %v729 = vld [vmem:[%s4 + $0x2e0] sm:$0xff]
    %v730 = vld [vmem:[%s4 + $0x2e8] sm:$0xff]
    %v731 = vld [vmem:[%s4 + $0x2f0] sm:$0xff]
    %v732 = vld [vmem:[%s4 + $0x2f8] sm:$0xff]
    %v733 = vld [vmem:[%s4 + $0x300] sm:$0xff]
    %v734 = vld [vmem:[%s4 + $0x308] sm:$0xff]
    %v735 = vld [vmem:[%s4 + $0x310] sm:$0xff]
    %v736 = vld [vmem:[%s4 + $0x318] sm:$0xff]
    %v737 = vld [vmem:[%s4 + $0x320] sm:$0xff]
    %v738 = vld [vmem:[%s4 + $0x328] sm:$0xff]
    %v739 = vld [vmem:[%s4 + $0x330] sm:$0xff]
    %v740 = vld [vmem:[%s4 + $0x338] sm:$0xff]
    %v741 = vld [vmem:[%s4 + $0x340] sm:$0xff]
    %v742 = vld [vmem:[%s4 + $0x348] sm:$0xff]
    %v743 = vld [vmem:[%s4 + $0x350] sm:$0xff]
    %v744 = vld [vmem:[%s4 + $0x358] sm:$0xff]
    %v745 = vld [vmem:[%s4 + $0x360] sm:$0xff]
    %v746 = vld [vmem:[%s4 + $0x368] sm:$0xff]
    %v747 = vld [vmem:[%s4 + $0x370] sm:$0xff]
    %v748 = vld [vmem:[%s4 + $0x378] sm:$0xff]
    %v749 = vld [vmem:[%s4 + $0x380] sm:$0xff]
    %v750 = vld [vmem:[%s4 + $0x388] sm:$0xff]
    %v751 = vld [vmem:[%s4 + $0x390] sm:$0xff]
    %v752 = vld [vmem:[%s4 + $0x398] sm:$0xff]
    %v753 = vld [vmem:[%s4 + $0x3a0] sm:$0xff]
    %v754 = vld [vmem:[%s4 + $0x3a8] sm:$0xff]
    %v755 = vld [vmem:[%s4 + $0x3b0] sm:$0xff]
    %v756 = vld [vmem:[%s4 + $0x3b8] sm:$0xff]
    %v757 = vld [vmem:[%s4 + $0x3c0] sm:$0xff]
    %v758 = vld [vmem:[%s4 + $0x3c8] sm:$0xff]
    %v759 = vld [vmem:[%s4 + $0x3d0] sm:$0xff]
    %v760 = vld [vmem:[%s4 + $0x3d8] sm:$0xff]
    %v761 = vld [vmem:[%s4 + $0x3e0] sm:$0xff]
    %vm762 = vcmask 850944
    %v764 = vsel %vm762, %v636, 0
    %766 = vmatprep.subr.mxu0 0.0
    %767 = vmatpush1.msra.mxu0 %v652
    %768 = vmatprep.subr.mxu0 0.0
    %769 = vmatpush1.msra.mxu0 %v651
    %770 = vmatprep.subr.mxu0 0.0
    %771 = vmatpush1.msra.mxu0 %v650
    %772 = vmatprep.subr.mxu0 0.0
    %773 = vmatpush1.msra.mxu0 %v649
    %774 = vmatprep.subr.mxu0 0.0
    %775 = vmatpush1.msra.mxu0 %v648
    %776 = vmatprep.subr.mxu0 0.0
    %777 = vmatpush1.msra.mxu0 %v647
    %778 = vmatprep.subr.mxu0 0.0
    %779 = vmatpush1.msra.mxu0 %v646
    %780 = vmatprep.subr.mxu0 0.0
    %781 = vmatpush1.msra.mxu0 %v645
    %782 = vmatprep.subr.mxu0 0.0
    %783 = vmatpush1.msra.mxu0 %v644
    %784 = vmatprep.subr.mxu0 0.0
    %785 = vmatpush1.msra.mxu0 %v643
    %786 = vmatprep.subr.mxu0 0.0
    %787 = vmatpush1.msra.mxu0 %v642
    %788 = vmatprep.subr.mxu0 0.0
    %789 = vmatpush1.msra.mxu0 %v641
    %790 = vmatprep.subr.mxu0 0.0
    %791 = vmatpush1.msra.mxu0 %v640
    %792 = vmatprep.subr.mxu0 0.0
    %793 = vmatpush1.msra.mxu0 %v639
    %794 = vmatprep.subr.mxu0 0.0
    %795 = vmatpush1.msra.mxu0 %v638
    %796 = vmatprep.subr.mxu0 0.0
    %797 = vmatpush1.msra.mxu0 %v637
    %798 = vmatprep.subr.mxu0 0.0
    %799 = vmatpush2.msra.mxu0 %v668
    %800 = vmatprep.subr.mxu0 0.0
    %801 = vmatpush2.msra.mxu0 %v667
    %802 = vmatprep.subr.mxu0 0.0
    %803 = vmatpush2.msra.mxu0 %v666
    %804 = vmatprep.subr.mxu0 0.0
    %805 = vmatpush2.msra.mxu0 %v665
    %806 = vmatprep.subr.mxu0 0.0
    %807 = vmatpush2.msra.mxu0 %v664
    %808 = vmatprep.subr.mxu0 0.0
    %809 = vmatpush2.msra.mxu0 %v663
    %810 = vmatprep.subr.mxu0 0.0
    %811 = vmatpush2.msra.mxu0 %v662
    %812 = vmatprep.subr.mxu0 0.0
    %813 = vmatpush2.msra.mxu0 %v661
    %814 = vmatprep.subr.mxu0 0.0
    %815 = vmatpush2.msra.mxu0 %v660
    %816 = vmatprep.subr.mxu0 0.0
    %817 = vmatpush2.msra.mxu0 %v659
    %818 = vmatprep.subr.mxu0 0.0
    %819 = vmatpush2.msra.mxu0 %v658
    %820 = vmatprep.subr.mxu0 0.0
    %821 = vmatpush2.msra.mxu0 %v657
    %822 = vmatprep.subr.mxu0 0.0
    %823 = vmatpush2.msra.mxu0 %v656
    %824 = vmatprep.subr.mxu0 0.0
    %825 = vmatpush2.msra.mxu0 %v655
    %826 = vmatprep.subr.mxu0 0.0
    %827 = vmatpush2.msra.mxu0 %v654
    %828 = vmatprep.subr.mxu0 0.0
    %829 = vmatpush2.msra.mxu0 %v653
    %830 = vmatprep.mubr.f32.mxu0 %v630
    %831 = vmatmul.mubr.f32.gmra.mxu0 %v629
    %v832 = vpop.f32.mrf.mxu0
    %v833 = vadd.f32 0.0, %v832
    %v834 = vpop.f32.mrf.mxu0
    %835 = vdwg.mxu0
    %836 = vmatprep.subr.mxu0 0.0
    %837 = vmatpush1.msra.mxu0 %v684
    %838 = vmatprep.subr.mxu0 0.0
    %839 = vmatpush1.msra.mxu0 %v683
    %840 = vmatprep.subr.mxu0 0.0
    %841 = vmatpush1.msra.mxu0 %v682
    %842 = vmatprep.subr.mxu0 0.0
    %843 = vmatpush1.msra.mxu0 %v681
    %844 = vmatprep.subr.mxu0 0.0
    %845 = vmatpush1.msra.mxu0 %v680
    %846 = vmatprep.subr.mxu0 0.0
    %847 = vmatpush1.msra.mxu0 %v679
    %848 = vmatprep.subr.mxu0 0.0
    %849 = vmatpush1.msra.mxu0 %v678
    %850 = vmatprep.subr.mxu0 0.0
    %851 = vmatpush1.msra.mxu0 %v677
    %852 = vmatprep.subr.mxu0 0.0
    %853 = vmatpush1.msra.mxu0 %v676
    %854 = vmatprep.subr.mxu0 0.0
    %855 = vmatpush1.msra.mxu0 %v675
    %856 = vmatprep.subr.mxu0 0.0
    %857 = vmatpush1.msra.mxu0 %v674
    %858 = vmatprep.subr.mxu0 0.0
    %859 = vmatpush1.msra.mxu0 %v673
    %860 = vmatprep.subr.mxu0 0.0
    %861 = vmatpush1.msra.mxu0 %v672
    %862 = vmatprep.subr.mxu0 0.0
    %863 = vmatpush1.msra.mxu0 %v671
    %864 = vmatprep.subr.mxu0 0.0
    %865 = vmatpush1.msra.mxu0 %v670
    %866 = vmatprep.subr.mxu0 0.0
    %867 = vmatpush1.msra.mxu0 %v669
    %868 = vmatprep.subr.mxu0 0.0
    %869 = vmatpush2.msra.mxu0 %v700
    %870 = vmatprep.subr.mxu0 0.0
    %871 = vmatpush2.msra.mxu0 %v699
    %872 = vmatprep.subr.mxu0 0.0
    %873 = vmatpush2.msra.mxu0 %v698
    %874 = vmatprep.subr.mxu0 0.0
    %875 = vmatpush2.msra.mxu0 %v697
    %876 = vmatprep.subr.mxu0 0.0
    %877 = vmatpush2.msra.mxu0 %v696
    %878 = vmatprep.subr.mxu0 0.0
    %879 = vmatpush2.msra.mxu0 %v695
    %880 = vmatprep.subr.mxu0 0.0
    %881 = vmatpush2.msra.mxu0 %v694
    %882 = vmatprep.subr.mxu0 0.0
    %883 = vmatpush2.msra.mxu0 %v693
    %884 = vmatprep.subr.mxu0 0.0
    %885 = vmatpush2.msra.mxu0 %v692
    %886 = vmatprep.subr.mxu0 0.0
    %887 = vmatpush2.msra.mxu0 %v691
    %888 = vmatprep.subr.mxu0 0.0
    %889 = vmatpush2.msra.mxu0 %v690
    %890 = vmatprep.subr.mxu0 0.0
    %891 = vmatpush2.msra.mxu0 %v689
    %892 = vmatprep.subr.mxu0 0.0
    %893 = vmatpush2.msra.mxu0 %v688
    %894 = vmatprep.subr.mxu0 0.0
    %895 = vmatpush2.msra.mxu0 %v687
    %896 = vmatprep.subr.mxu0 0.0
    %897 = vmatpush2.msra.mxu0 %v686
    %898 = vmatprep.subr.mxu0 0.0
    %899 = vmatpush2.msra.mxu0 %v685
    %900 = vmatprep.mubr.f32.mxu0 %v632
    %901 = vmatmul.mubr.f32.gmra.mxu0 %v631
    %v902 = vpop.f32.mrf.mxu0
    %v903 = vadd.f32 %v833, %v902
    %v904 = vpop.f32.mrf.mxu0
    %905 = vdwg.mxu0
    %906 = vmatprep.subr.mxu0 0.0
    %907 = vmatpush1.msra.mxu0 %v716
    %908 = vmatprep.subr.mxu0 0.0
    %909 = vmatpush1.msra.mxu0 %v715
    %910 = vmatprep.subr.mxu0 0.0
    %911 = vmatpush1.msra.mxu0 %v714
    %912 = vmatprep.subr.mxu0 0.0
    %913 = vmatpush1.msra.mxu0 %v713
    %914 = vmatprep.subr.mxu0 0.0
    %915 = vmatpush1.msra.mxu0 %v712
    %916 = vmatprep.subr.mxu0 0.0
    %917 = vmatpush1.msra.mxu0 %v711
    %918 = vmatprep.subr.mxu0 0.0
    %919 = vmatpush1.msra.mxu0 %v710
    %920 = vmatprep.subr.mxu0 0.0
    %921 = vmatpush1.msra.mxu0 %v709
    %922 = vmatprep.subr.mxu0 0.0
    %923 = vmatpush1.msra.mxu0 %v708
    %924 = vmatprep.subr.mxu0 0.0
    %925 = vmatpush1.msra.mxu0 %v707
    %926 = vmatprep.subr.mxu0 0.0
    %927 = vmatpush1.msra.mxu0 %v706
    %928 = vmatprep.subr.mxu0 0.0
    %929 = vmatpush1.msra.mxu0 %v705
    %930 = vmatprep.subr.mxu0 0.0
    %931 = vmatpush1.msra.mxu0 %v704
    %932 = vmatprep.subr.mxu0 0.0
    %933 = vmatpush1.msra.mxu0 %v703
    %934 = vmatprep.subr.mxu0 0.0
    %935 = vmatpush1.msra.mxu0 %v702
    %936 = vmatprep.subr.mxu0 0.0
    %937 = vmatpush1.msra.mxu0 %v701
    %938 = vmatprep.subr.mxu0 0.0
    %939 = vmatpush2.msra.mxu0 %v732
    %940 = vmatprep.subr.mxu0 0.0
    %941 = vmatpush2.msra.mxu0 %v731
    %942 = vmatprep.subr.mxu0 0.0
    %943 = vmatpush2.msra.mxu0 %v730
    %944 = vmatprep.subr.mxu0 0.0
    %945 = vmatpush2.msra.mxu0 %v729
    %946 = vmatprep.subr.mxu0 0.0
    %947 = vmatpush2.msra.mxu0 %v728
    %948 = vmatprep.subr.mxu0 0.0
    %949 = vmatpush2.msra.mxu0 %v727
    %950 = vmatprep.subr.mxu0 0.0
    %951 = vmatpush2.msra.mxu0 %v726
    %952 = vmatprep.subr.mxu0 0.0
    %953 = vmatpush2.msra.mxu0 %v725
    %954 = vmatprep.subr.mxu0 0.0
    %955 = vmatpush2.msra.mxu0 %v724
    %956 = vmatprep.subr.mxu0 0.0
    %957 = vmatpush2.msra.mxu0 %v723
    %958 = vmatprep.subr.mxu0 0.0
    %959 = vmatpush2.msra.mxu0 %v722
    %960 = vmatprep.subr.mxu0 0.0
    %961 = vmatpush2.msra.mxu0 %v721
    %962 = vmatprep.subr.mxu0 0.0
    %963 = vmatpush2.msra.mxu0 %v720
    %964 = vmatprep.subr.mxu0 0.0
    %965 = vmatpush2.msra.mxu0 %v719
    %966 = vmatprep.subr.mxu0 0.0
    %967 = vmatpush2.msra.mxu0 %v718
    %968 = vmatprep.subr.mxu0 0.0
    %969 = vmatpush2.msra.mxu0 %v717
    %970 = vmatprep.mubr.f32.mxu0 %v634
    %971 = vmatmul.mubr.f32.gmra.mxu0 %v633
    %v972 = vpop.f32.mrf.mxu0
    %v973 = vadd.f32 %v903, %v972
    %v974 = vpop.f32.mrf.mxu0
    %975 = vdwg.mxu0
    %976 = vmatprep.subr.mxu0 0.0
    %977 = vmatpush1.msra.mxu0 %v748
    %978 = vmatprep.subr.mxu0 0.0
    %979 = vmatpush1.msra.mxu0 %v747
    %980 = vmatprep.subr.mxu0 0.0
    %981 = vmatpush1.msra.mxu0 %v746
    %982 = vmatprep.subr.mxu0 0.0
    %983 = vmatpush1.msra.mxu0 %v745
    %984 = vmatprep.subr.mxu0 0.0
    %985 = vmatpush1.msra.mxu0 %v744
    %986 = vmatprep.subr.mxu0 0.0
    %987 = vmatpush1.msra.mxu0 %v743
    %988 = vmatprep.subr.mxu0 0.0
    %989 = vmatpush1.msra.mxu0 %v742
    %990 = vmatprep.subr.mxu0 0.0
    %991 = vmatpush1.msra.mxu0 %v741
    %992 = vmatprep.subr.mxu0 0.0
    %993 = vmatpush1.msra.mxu0 %v740
    %994 = vmatprep.subr.mxu0 0.0
    %995 = vmatpush1.msra.mxu0 %v739
    %996 = vmatprep.subr.mxu0 0.0
    %997 = vmatpush1.msra.mxu0 %v738
    %998 = vmatprep.subr.mxu0 0.0
    %999 = vmatpush1.msra.mxu0 %v737
    %1000 = vmatprep.subr.mxu0 0.0
    %1001 = vmatpush1.msra.mxu0 %v736
    %1002 = vmatprep.subr.mxu0 0.0
    %1003 = vmatpush1.msra.mxu0 %v735
    %1004 = vmatprep.subr.mxu0 0.0
    %1005 = vmatpush1.msra.mxu0 %v734
    %1006 = vmatprep.subr.mxu0 0.0
    %1007 = vmatpush1.msra.mxu0 %v733
    %1008 = vmatprep.subr.mxu0 0.0
    %1009 = vmatpush2.msra.mxu0 0.0
    %1010 = vmatprep.subr.mxu0 0.0
    %1011 = vmatpush2.msra.mxu0 0.0
    %1012 = vmatprep.subr.mxu0 0.0
    %1013 = vmatpush2.msra.mxu0 0.0
    %1014 = vmatprep.subr.mxu0 0.0
    %1015 = vmatpush2.msra.mxu0 %v761
    %1016 = vmatprep.subr.mxu0 0.0
    %1017 = vmatpush2.msra.mxu0 %v760
    %1018 = vmatprep.subr.mxu0 0.0
    %1019 = vmatpush2.msra.mxu0 %v759
    %1020 = vmatprep.subr.mxu0 0.0
    %1021 = vmatpush2.msra.mxu0 %v758
    %1022 = vmatprep.subr.mxu0 0.0
    %1023 = vmatpush2.msra.mxu0 %v757
    %1024 = vmatprep.subr.mxu0 0.0
    %1025 = vmatpush2.msra.mxu0 %v756
    %1026 = vmatprep.subr.mxu0 0.0
    %1027 = vmatpush2.msra.mxu0 %v755
    %1028 = vmatprep.subr.mxu0 0.0
    %1029 = vmatpush2.msra.mxu0 %v754
    %1030 = vmatprep.subr.mxu0 0.0
    %1031 = vmatpush2.msra.mxu0 %v753
    %1032 = vmatprep.subr.mxu0 0.0
    %1033 = vmatpush2.msra.mxu0 %v752
    %1034 = vmatprep.subr.mxu0 0.0
    %1035 = vmatpush2.msra.mxu0 %v751
    %1036 = vmatprep.subr.mxu0 0.0
    %1037 = vmatpush2.msra.mxu0 %v750
    %1038 = vmatprep.subr.mxu0 0.0
    %1039 = vmatpush2.msra.mxu0 %v749
    %1040 = vmatprep.mubr.f32.mxu0 %v764
    %1041 = vmatmul.mubr.f32.gmra.mxu0 %v635
    %v1042 = vpop.f32.mrf.mxu0
    %v1043 = vadd.f32 %v973, %v1042
    %v1044 = vpop.f32.mrf.mxu0
    %1045 = vdwg.mxu0
    %v1046 = vmul.f32 %v1043, %v1043
    %vm1047 = vcmask 254976
    %v1048 = vsel %vm1047, %v1046, 0.0
    %1049 = vadd.xlane.f32.xlu0 %v1048
    %v1050 = vpop.xlane.xlu0 %1049
    %v1051 = vmax.f32 %v1050, 1e-24
    %v1052 = vrsqrt.pop %v1051
    %v1053 = vmul.f32 %v1043, %v1052
    %v1054 = vld [vmem:[%s5] sm:$0xff]
    %v1055 = vld [vmem:[%s5 + $0x8] sm:$0xff]
    %v1056 = vld [vmem:[%s5 + $0x10] sm:$0xff]
    %v1057 = vld [vmem:[%s5 + $0x18] sm:$0xff]
    %vm1058 = vcmask 261120
    %v1060 = vsel %vm1058, %v1053, 0
    %1062 = vmatprep.subr.mxu0 0.0
    %1063 = vmatpush1.msra.mxu0 0.0
    %1064 = vmatprep.subr.mxu0 0.0
    %1065 = vmatpush1.msra.mxu0 0.0
    %1066 = vmatprep.subr.mxu0 0.0
    %1067 = vmatpush1.msra.mxu0 0.0
    %1068 = vmatprep.subr.mxu0 0.0
    %1069 = vmatpush1.msra.mxu0 0.0
    %1070 = vmatprep.subr.mxu0 0.0
    %1071 = vmatpush1.msra.mxu0 0.0
    %1072 = vmatprep.subr.mxu0 0.0
    %1073 = vmatpush1.msra.mxu0 0.0
    %1074 = vmatprep.subr.mxu0 0.0
    %1075 = vmatpush1.msra.mxu0 0.0
    %1076 = vmatprep.subr.mxu0 0.0
    %1077 = vmatpush1.msra.mxu0 0.0
    %1078 = vmatprep.subr.mxu0 0.0
    %1079 = vmatpush1.msra.mxu0 0.0
    %1080 = vmatprep.subr.mxu0 0.0
    %1081 = vmatpush1.msra.mxu0 0.0
    %1082 = vmatprep.subr.mxu0 0.0
    %1083 = vmatpush1.msra.mxu0 0.0
    %1084 = vmatprep.subr.mxu0 0.0
    %1085 = vmatpush1.msra.mxu0 0.0
    %1086 = vmatprep.subr.mxu0 0.0
    %1087 = vmatpush1.msra.mxu0 %v1057
    %1088 = vmatprep.subr.mxu0 0.0
    %1089 = vmatpush1.msra.mxu0 %v1056
    %1090 = vmatprep.subr.mxu0 0.0
    %1091 = vmatpush1.msra.mxu0 %v1055
    %1092 = vmatprep.subr.mxu0 0.0
    %1093 = vmatpush1.msra.mxu0 %v1054
    %1094 = vmatprep.subr.mxu0 0.0
    %1095 = vmatpush2.msra.mxu0 0.0
    %1096 = vmatprep.subr.mxu0 0.0
    %1097 = vmatpush2.msra.mxu0 0.0
    %1098 = vmatprep.subr.mxu0 0.0
    %1099 = vmatpush2.msra.mxu0 0.0
    %1100 = vmatprep.subr.mxu0 0.0
    %1101 = vmatpush2.msra.mxu0 0.0
    %1102 = vmatprep.subr.mxu0 0.0
    %1103 = vmatpush2.msra.mxu0 0.0
    %1104 = vmatprep.subr.mxu0 0.0
    %1105 = vmatpush2.msra.mxu0 0.0
    %1106 = vmatprep.subr.mxu0 0.0
    %1107 = vmatpush2.msra.mxu0 0.0
    %1108 = vmatprep.subr.mxu0 0.0
    %1109 = vmatpush2.msra.mxu0 0.0
    %1110 = vmatprep.subr.mxu0 0.0
    %1111 = vmatpush2.msra.mxu0 0.0
    %1112 = vmatprep.subr.mxu0 0.0
    %1113 = vmatpush2.msra.mxu0 0.0
    %1114 = vmatprep.subr.mxu0 0.0
    %1115 = vmatpush2.msra.mxu0 0.0
    %1116 = vmatprep.subr.mxu0 0.0
    %1117 = vmatpush2.msra.mxu0 0.0
    %1118 = vmatprep.subr.mxu0 0.0
    %1119 = vmatpush2.msra.mxu0 0.0
    %1120 = vmatprep.subr.mxu0 0.0
    %1121 = vmatpush2.msra.mxu0 0.0
    %1122 = vmatprep.subr.mxu0 0.0
    %1123 = vmatpush2.msra.mxu0 0.0
    %1124 = vmatprep.subr.mxu0 0.0
    %1125 = vmatpush2.msra.mxu0 0.0
    %1126 = vmatprep.mubr.f32.mxu0 0.0
    %1127 = vmatmul.mubr.f32.gmra.mxu0 %v1060
    %v1128 = vpop.f32.mrf.mxu0
    %v1129 = vadd.f32 0.0, %v1128
    %v1130 = vpop.f32.mrf.mxu0
    %1131 = vdwg.mxu0
    %v1132 = vmul.f32 %v1129, 0.1
    %v1133 = vmul.f32 %v1132, %v1132
    %v1134 = vsub.f32 1.0, %v1133
    %v1135 = vmax.f32 %v1134, 0.0
    %v1136 = vrsqrt.pop %v1135
    %v1137 = vmul.f32 %v1135, %v1136
    %vm1138 = vcmp.eq.f32.partialorder %v1135, inf
    %v1139 = vsel %vm1138, %v1135, %v1137
    %vm1140 = vcmp.eq.f32.partialorder %v1135, 0.0
    %v1141 = vand.u32 %v1135, 2147483648
    %v1142 = vsel %vm1140, %v1141, %v1139
    %v1143 = vmul.f32 %v1129, 1.442695
    %v1144 = vpow.pop %v1143
    %v1145 = vmul.f32 %v1129, 0.5403023
    %v1146 = vmul.f32 %v1142, 8.41471
    %v1147 = vsub.f32 %v1145, %v1146
    %v1148 = vmul.f32 %v1147, 1.442695
    %v1149 = vpow.pop %v1148
    %vm1150 = vcmask 173056
    %v1151 = vsel %vm1150, %v1144, 0.0
    %1152 = vadd.xlane.f32.xlu0 %v1151
    %v1153 = vpop.xlane.xlu0 %1152
    %v1154 = vsub.f32 %v1153, %v1144
    %v1155 = vadd.f32 %v1154, %v1149
    %v1156 = vrcp.pop %v1155
    %v1157 = vmul.f32 %v1149, %v1156
    %1159 = vrot.lane.b32.xlu0 %v1157, 32
    %v1160 = vpop.permute.xlu0 %1159
    %v1162 = vsel %vm1058, %v1043, %v1160
    %vm1163 = vcmask 441344
    %v1164 = vsel %vm1163, %v1162, 0.0
    %1165 = vst [vmem:[#allocation2] sm:$0x3] %v1164
    // Predicated region
    $region26: #{tpu_custom_call.1} parent=1 // pred_check
      _
    $region27: #{tpu_custom_call.1} parent=1 // pred_check_branch
      %1167 = sbr.rel (0) target = $region29
    $region28: #{tpu_custom_call.1} parent=1 // pred_region
      %s1169 = ssub.s32 32, 32
      %1170 = vsyncadd [#allocation3], %s1169
      %s1172 = sshll.u32 [#allocation2], 4
      %s1173 = int_to_ptr.vmem [resolvable:$true] %s1172
      %1175 = dma.vmem_to_hbm [thread:$0]  %s1173, 32, %s6, [#allocation3]
    $region29: #{tpu_custom_call.1} parent=1 // pred_fallthru
      _
    // Predicated region
    $region30: #{tpu_custom_call.1} parent=1 // pred_check
      _
    $region31: #{tpu_custom_call.1} parent=1 // pred_check_branch
      %1177 = sbr.rel (0) target = $region33
    $region32: #{tpu_custom_call.1} parent=1 // pred_region
      %1178 = dma.done [#allocation3], 32
    $region33: #{tpu_custom_call.1} parent=1 // pred_fallthru
      _
    %1179 = vsyncpa [#allocation3], 1

</llo_original>
